<compile_context>
chip_gen: v7x
topology: tpu7x:2x2x1
jax: 0.10.0
libtpu: 0.0.40
codegen_flags: <defaults>
</compile_context>

<pallas_src>
import jax
import jax.numpy as jnp
from jax.experimental import pallas as pl
from jax.experimental.pallas import tpu as pltpu


# ----------------------------- Pallas kernel ---------------------------------

def _w8dx_kernel(x_ref, t_ref, wq_ref, wmax_ref, xunq_ref, wunq_ref, bias_ref, o_ref):
    # x_ref    : [tm, K]  f32   activation tile
    # t_ref    : [1,  K]  f32   mask (0 on outlier channels, 1 elsewhere)
    # wq_ref   : [K,  tn] bf16  quantized weight tile (integer-valued, exact in bf16)
    # wmax_ref : [1,  tn] f32   per-output-channel weight scale (abs-max / 127)
    # xunq_ref : [tm, A]  f32   gathered outlier activations
    # wunq_ref : [A,  tn] f32   dequantized outlier weight rows
    # bias_ref : [1,  tn] f32
    # o_ref    : [tm, tn] f32
    x = x_ref[...]
    t = t_ref[...]

    # Zero the outlier channels, then per-row symmetric int8 quantization.
    xq = x * t
    x_max = jnp.max(jnp.abs(xq), axis=-1, keepdims=True) / 127.0           # [tm, 1]
    # Guard all-zero rows (e.g. zero-padded M remainder): avoid 0/0 -> NaN.
    x_max_safe = jnp.where(x_max > 0.0, x_max, 1.0)
    # trunc == torch ".to(int8)" truncation toward zero; integer-valued f32 in [-127, 127].
    x_qi = jnp.trunc(xq / x_max_safe)

    # "MatMulInteger": both operands are exact small integers, so a bf16 x bf16 -> f32 MXU
    # matmul is bit-exact and runs at native MXU rate on v5e / v6e / v7x.
    res_int = jnp.dot(x_qi.astype(jnp.bfloat16), wq_ref[...],
                      preferred_element_type=jnp.float32)                  # [tm, tn]

    # Rescale: two broadcast multiplies ([tm,1] then [1,tn]); no outer-product temp.
    res_q = (res_int * x_max) * wmax_ref[...]                              # [tm, tn]

    # Full-precision path for the outlier channels (tiny A -> negligible FLOPs).
    res_unq = jnp.dot(xunq_ref[...], wunq_ref[...],
                      preferred_element_type=jnp.float32)                  # [tm, tn]

    o_ref[...] = (res_q + res_unq + bias_ref[...]).astype(o_ref.dtype)


# ----------------------------- tiling helpers ---------------------------------

def _round_up(x, m):
    return ((x + m - 1) // m) * m


def _pick_n_tile(n, candidates=(512, 256, 128)):
    for c in candidates:
        if n % c == 0:
            return c
    return n  # full-extent fallback (always legal for a BlockSpec)


def _w8dx_pallas_2d(x2d, t, weight_q_bf16, w_max, x_unq, w_unq, bias):
    """x2d: [M, K] f32 (M already padded to a multiple of tm chosen here)."""
    M, K = x2d.shape
    _, N = weight_q_bf16.shape
    A = x_unq.shape[-1]

    # M tile: large (MXU-friendly) but never bigger than the (padded) problem.
    tm = min(256, M)
    assert M % tm == 0 and tm % 8 == 0

    # N tile: keep the weight slab a few MiB and lane-dense output stores.
    tn = _pick_n_tile(N)
    grid = (N // tn, M // tm)   # N outer -> weight tile resident across the M sweep.

    # Explicit VMEM budget (double-buffered inputs + output), clamped for v7x (64 MiB phys).
    step_bytes = (tm * K * 4        # x tile (f32)
                  + K * tn * 2      # weight tile (bf16)
                  + tm * A * 4      # outlier activations
                  + A * tn * 4      # outlier weight rows
                  + tm * tn * 4     # output tile
                  + (K + 3 * tn) * 4)   # mask, scales, bias
    vmem_limit = int(2.2 * step_bytes) + (2 << 20)
    vmem_limit = max(4 << 20, min(vmem_limit, 48 << 20))

    return pl.pallas_call(
        _w8dx_kernel,
        out_shape=jax.ShapeDtypeStruct((M, N), x2d.dtype),
        grid_spec=pltpu.PrefetchScalarGridSpec(
            num_scalar_prefetch=0,
            grid=grid,
            in_specs=[
                pl.BlockSpec((tm, K), lambda j, i: (i, 0)),   # x tile
                pl.BlockSpec((1, K),  lambda j, i: (0, 0)),   # mask t
                pl.BlockSpec((K, tn), lambda j, i: (0, j)),   # bf16 weight tile (resident over i)
                pl.BlockSpec((1, tn), lambda j, i: (0, j)),   # weight scales
                pl.BlockSpec((tm, A), lambda j, i: (i, 0)),   # outlier activations
                pl.BlockSpec((A, tn), lambda j, i: (0, j)),   # outlier weight rows (dequantized)
                pl.BlockSpec((1, tn), lambda j, i: (0, j)),   # bias
            ],
            out_specs=pl.BlockSpec((tm, tn), lambda j, i: (i, j)),
        ),
        compiler_params=pltpu.CompilerParams(
            dimension_semantics=("parallel", "parallel"),
            vmem_limit_bytes=vmem_limit,
        ),
    )(x2d, t, weight_q_bf16, w_max, x_unq, w_unq, bias)


# ------------------------------ JAX glue --------------------------------------

def quantize_mat(mat):
    """Per-last-dim symmetric int8 quantization (matches torch quantize_mat)."""
    max_val = (jnp.max(jnp.abs(mat), axis=-1) / 127.0).astype(mat.dtype)
    q = jnp.trunc(mat / max_val[..., None]).astype(jnp.int8)
    return q, max_val


class W8DXLinear:
    """JAX/Pallas port of the PyTorch W8DXLinear module."""

    def __init__(self, origin_weight, bias=None, alpha=32):
        # origin_weight: [out_features, in_features]
        self.alpha = alpha
        self.dtype = origin_weight.dtype
        wq, max_val = quantize_mat(origin_weight)
        self.weight_q = wq.T                                      # [in, out] int8 (== torch weight_q.t())
        # Pre-converted once: int8 values are exactly representable in bf16, MXU-native.
        self.weight_q_bf16 = self.weight_q.astype(jnp.bfloat16)   # [in, out] bf16
        self.max_val = max_val                                    # [out]
        self.out_features = origin_weight.shape[0]
        self.bias = bias                                          # [out] or None

    def __call__(self, x):
        # x: [..., in_features]
        orig_shape = x.shape
        K = orig_shape[-1]
        N = self.out_features
        A = self.alpha
        x2d = x.reshape(-1, K)
        M = x2d.shape[0]

        # Top-k outlier input channels (per-column abs-max over all rows). Data-dependent glue.
        col_max = jnp.max(jnp.abs(x2d), axis=0)                       # [K]
        _, idx_unq = jax.lax.top_k(col_max, A)                        # [A]
        t = jnp.ones((K,), dtype=x2d.dtype).at[idx_unq].set(0.0)      # mask

        # Gather outlier activations / weight rows; dequantize the tiny gathered weight slice.
        x_unq = jnp.take(x2d, idx_unq, axis=1)                        # [M, A]
        w_unq = (jnp.take(self.weight_q, idx_unq, axis=0).astype(jnp.float32)
                 * self.max_val[None, :]).astype(x2d.dtype)           # [A, N]

        bias = (self.bias if self.bias is not None
                else jnp.zeros((N,), dtype=x2d.dtype))

        # Pad M so no rows are dropped; padded rows are all-zero (handled by the in-kernel
        # zero-row guard) and sliced off below.
        M_pad = _round_up(M, 8)
        tm = min(256, M_pad)
        M_pad = _round_up(M_pad, tm)
        if M_pad != M:
            pad = M_pad - M
            x2d_p = jnp.pad(x2d, ((0, pad), (0, 0)))
            x_unq_p = jnp.pad(x_unq, ((0, pad), (0, 0)))
        else:
            x2d_p, x_unq_p = x2d, x_unq

        out2d = _w8dx_pallas_2d(
            x2d_p,
            t.reshape(1, K),
            self.weight_q_bf16,
            self.max_val.reshape(1, N).astype(jnp.float32),
            x_unq_p,
            w_unq,
            bias.reshape(1, N).astype(x2d.dtype),
        )
        return out2d[:M].reshape(*orig_shape[:-1], N)


# --------------------------- pure-JAX reference --------------------------------

def _reference_forward(x, origin_weight, bias, alpha):
    """Direct transliteration of the PyTorch forward for correctness checking."""
    wq, w_max = quantize_mat(origin_weight)
    weight_q_t = wq.T                                                  # [K, N] int8
    K = x.shape[-1]
    x2d = x.reshape(-1, K)

    col_max = jnp.max(jnp.abs(x2d), axis=0)
    _, idx = jax.lax.top_k(col_max, alpha)
    t = jnp.ones((K,), dtype=x.dtype).at[idx].set(0.0)

    x_q = x * t
    x_unq = jnp.take(x, idx, axis=-1)
    x_qi, x_max = quantize_mat(x_q)

    res_int = jnp.matmul(x_qi.astype(jnp.float32), weight_q_t.astype(jnp.float32))
    mx = x_max[..., None] * w_max[None, :]
    res_q = (res_int * mx.astype(jnp.float32)).astype(x.dtype)

    weight_unq = weight_q_t[idx, :].astype(jnp.float32) * w_max[None, :]
    res_unq = jnp.matmul(x_unq, weight_unq.astype(x.dtype))
    if bias is not None:
        res_unq = res_unq + bias
    return res_q + res_unq


# ----------------------------------- main ---------------------------------------

def _run_case(key, B, S, K, N, alpha):
    k_w, k_b, k_x = jax.random.split(key, 3)
    origin_weight = jax.random.normal(k_w, (N, K), dtype=jnp.float32)
    bias = jax.random.normal(k_b, (N,), dtype=jnp.float32)
    x = jax.random.normal(k_x, (B, S, K), dtype=jnp.float32)

    layer = W8DXLinear(origin_weight, bias=bias, alpha=alpha)
    out = jax.block_until_ready(layer(x))

    ref = _reference_forward(x, origin_weight, bias, alpha)
    assert out.shape == (B, S, N), (out.shape, (B, S, N))
    assert jnp.allclose(out, ref, rtol=1e-5, atol=1e-4), (
        f"max err {jnp.max(jnp.abs(out - ref))}")


if __name__ == "__main__":
    key = jax.random.PRNGKey(0)
    k1, k2 = jax.random.split(key)

    # Small baseline shapes (batch=2, seq=8, in=64, out=64, alpha=8).
    _run_case(k1, B=2, S=8, K=64, N=64, alpha=8)

    # Exercises M padding (M=26 -> 32), the zero-row guard, and N tiling (tn=128, 3 tiles).
    _run_case(k2, B=2, S=13, K=128, N=384, alpha=16)

    print("KERNEL_OK")
</pallas_src>

<mosaic_0001>
module attributes {stable_mosaic.version = 11 : i64} {
  func.func @_w8dx_kernel(%arg0: i32, %arg1: i32, %arg2: memref<16x64xf32, #tpu.memory_space<vmem>>, %arg3: memref<1x64xf32, #tpu.memory_space<vmem>>, %arg4: memref<64x64xbf16, #tpu.memory_space<vmem>>, %arg5: memref<1x64xf32, #tpu.memory_space<vmem>>, %arg6: memref<16x8xf32, #tpu.memory_space<vmem>>, %arg7: memref<8x64xf32, #tpu.memory_space<vmem>>, %arg8: memref<1x64xf32, #tpu.memory_space<vmem>>, %arg9: memref<16x64xf32, #tpu.memory_space<vmem>>) attributes {dimension_semantics = [#tpu.dimension_semantics<parallel>, #tpu.dimension_semantics<parallel>], iteration_bounds = array<i64: 1, 1>, scalar_prefetch = 0 : i64, scratch_operands = 0 : i64, tpu.core_type = #tpu.core_type<tc>, window_params = [{transform_indices = @transform_0, window_bounds = array<i64: 16, 64>}, {pipeline_mode = #tpu.pipeline_mode<synchronous>, transform_indices = @transform_1, window_bounds = array<i64: 1, 64>}, {transform_indices = @transform_2, window_bounds = array<i64: 64, 64>}, {transform_indices = @transform_3, window_bounds = array<i64: 1, 64>}, {transform_indices = @transform_4, window_bounds = array<i64: 16, 8>}, {transform_indices = @transform_5, window_bounds = array<i64: 8, 64>}, {transform_indices = @transform_6, window_bounds = array<i64: 1, 64>}, {transform_indices = @transform_7, window_bounds = array<i64: 16, 64>}]} {
    %c0 = arith.constant 0 : index
    %c0_0 = arith.constant 0 : index
    %0 = vector.load %arg2[%c0, %c0_0] : memref<16x64xf32, #tpu.memory_space<vmem>>, vector<16x64xf32>
    %c0_1 = arith.constant 0 : index
    %c0_2 = arith.constant 0 : index
    %1 = vector.load %arg3[%c0_1, %c0_2] : memref<1x64xf32, #tpu.memory_space<vmem>>, vector<1x64xf32>
    %2 = vector.broadcast %1 : vector<1x64xf32> to vector<16x64xf32>
    %3 = arith.mulf %0, %2 : vector<16x64xf32>
    %4 = math.absf %3 : vector<16x64xf32>
    %cst = arith.constant dense<0xFF800000> : vector<16xf32>
    %5 = vector.multi_reduction <maximumf>, %4, %cst [1] : vector<16x64xf32> to vector<16xf32>
    %6 = vector.shape_cast %5 : vector<16xf32> to vector<16x1xf32>
    %cst_3 = arith.constant 1.270000e+02 : f32
    %7 = vector.broadcast %cst_3 : f32 to vector<16x1xf32>
    %8 = arith.divf %6, %7 : vector<16x1xf32>
    %cst_4 = arith.constant 0.000000e+00 : f32
    %9 = vector.broadcast %cst_4 : f32 to vector<16x1xf32>
    %10 = arith.cmpf ogt, %8, %9 : vector<16x1xf32>
    %cst_5 = arith.constant 1.000000e+00 : f32
    %11 = vector.broadcast %cst_5 : f32 to vector<16x1xf32>
    %12 = arith.select %10, %8, %11 : vector<16x1xi1>, vector<16x1xf32>
    %13 = vector.broadcast %12 : vector<16x1xf32> to vector<16x64xf32>
    %14 = arith.divf %3, %13 : vector<16x64xf32>
    %cst_6 = arith.constant 0.000000e+00 : f32
    %15 = vector.broadcast %cst_6 : f32 to vector<16x64xf32>
    %16 = arith.cmpf olt, %14, %15 : vector<16x64xf32>
    %17 = math.ceil %14 : vector<16x64xf32>
    %18 = math.floor %14 : vector<16x64xf32>
    %19 = arith.select %16, %17, %18 : vector<16x64xi1>, vector<16x64xf32>
    %20 = arith.truncf %19 : vector<16x64xf32> to vector<16x64xbf16>
    %c0_7 = arith.constant 0 : index
    %c0_8 = arith.constant 0 : index
    %21 = vector.load %arg4[%c0_7, %c0_8] : memref<64x64xbf16, #tpu.memory_space<vmem>>, vector<64x64xbf16>
    %cst_9 = arith.constant dense<0.000000e+00> : vector<16x64xf32>
    %22 = tpu.matmul %20, %21, %cst_9 {dimension_numbers = #tpu.dot_dimension_numbers<[1], [0], [0], [1], [0, 0, 1, 1], [], []>} : vector<16x64xbf16>, vector<64x64xbf16>, vector<16x64xf32> -> vector<16x64xf32>
    %23 = vector.broadcast %8 : vector<16x1xf32> to vector<16x64xf32>
    %24 = arith.mulf %22, %23 : vector<16x64xf32>
    %c0_10 = arith.constant 0 : index
    %c0_11 = arith.constant 0 : index
    %25 = vector.load %arg5[%c0_10, %c0_11] : memref<1x64xf32, #tpu.memory_space<vmem>>, vector<1x64xf32>
    %26 = vector.broadcast %25 : vector<1x64xf32> to vector<16x64xf32>
    %27 = arith.mulf %24, %26 : vector<16x64xf32>
    %c0_12 = arith.constant 0 : index
    %c0_13 = arith.constant 0 : index
    %28 = vector.load %arg6[%c0_12, %c0_13] : memref<16x8xf32, #tpu.memory_space<vmem>>, vector<16x8xf32>
    %c0_14 = arith.constant 0 : index
    %c0_15 = arith.constant 0 : index
    %29 = vector.load %arg7[%c0_14, %c0_15] : memref<8x64xf32, #tpu.memory_space<vmem>>, vector<8x64xf32>
    %cst_16 = arith.constant dense<0.000000e+00> : vector<16x64xf32>
    %30 = tpu.matmul %28, %29, %cst_16 {dimension_numbers = #tpu.dot_dimension_numbers<[1], [0], [0], [1], [0, 0, 1, 1], [], []>} : vector<16x8xf32>, vector<8x64xf32>, vector<16x64xf32> -> vector<16x64xf32>
    %31 = arith.addf %27, %30 : vector<16x64xf32>
    %c0_17 = arith.constant 0 : index
    %c0_18 = arith.constant 0 : index
    %32 = vector.load %arg8[%c0_17, %c0_18] : memref<1x64xf32, #tpu.memory_space<vmem>>, vector<1x64xf32>
    %33 = vector.broadcast %32 : vector<1x64xf32> to vector<16x64xf32>
    %34 = arith.addf %31, %33 : vector<16x64xf32>
    %c0_19 = arith.constant 0 : index
    %c0_20 = arith.constant 0 : index
    %35 = vector.load %arg9[%c0_19, %c0_20] : memref<16x64xf32, #tpu.memory_space<vmem>>, vector<16x64xf32>
    tpu.vector_store %arg9[%c0_19, %c0_20], %34 {strides = array<i32>} : memref<16x64xf32, #tpu.memory_space<vmem>>, vector<16x64xf32>,
    return
  }
  func.func @transform_0(%arg0: i32, %arg1: i32) -> (i32, i32) {
    %c0_i32 = arith.constant 0 : i32
    %c0_i32_0 = arith.constant 0 : i32
    return %arg1, %c0_i32 : i32, i32
  }
  func.func @transform_1(%arg0: i32, %arg1: i32) -> (i32, i32) {
    %c0_i32 = arith.constant 0 : i32
    %c0_i32_0 = arith.constant 0 : i32
    %c0_i32_1 = arith.constant 0 : i32
    return %c0_i32, %c0_i32_0 : i32, i32
  }
  func.func @transform_2(%arg0: i32, %arg1: i32) -> (i32, i32) {
    %c0_i32 = arith.constant 0 : i32
    %c0_i32_0 = arith.constant 0 : i32
    return %c0_i32, %arg0 : i32, i32
  }
  func.func @transform_3(%arg0: i32, %arg1: i32) -> (i32, i32) {
    %c0_i32 = arith.constant 0 : i32
    %c0_i32_0 = arith.constant 0 : i32
    return %c0_i32, %arg0 : i32, i32
  }
  func.func @transform_4(%arg0: i32, %arg1: i32) -> (i32, i32) {
    %c0_i32 = arith.constant 0 : i32
    %c0_i32_0 = arith.constant 0 : i32
    return %arg1, %c0_i32 : i32, i32
  }
  func.func @transform_5(%arg0: i32, %arg1: i32) -> (i32, i32) {
    %c0_i32 = arith.constant 0 : i32
    %c0_i32_0 = arith.constant 0 : i32
    return %c0_i32, %arg0 : i32, i32
  }
  func.func @transform_6(%arg0: i32, %arg1: i32) -> (i32, i32) {
    %c0_i32 = arith.constant 0 : i32
    %c0_i32_0 = arith.constant 0 : i32
    return %c0_i32, %arg0 : i32, i32
  }
  func.func @transform_7(%arg0: i32, %arg1: i32) -> (i32, i32) {
    %c0_i32 = arith.constant 0 : i32
    return %arg1, %arg0 : i32, i32
  }
}

</mosaic_0001>

<llo_original>
// kernel: tpu_custom_call.1
$region0: #{tpu_custom_call.1}
  #allocation0 [shape = 'u32[]', space=smem, size = 0x4, offset = 0x4, fixed_abs, tag = 'smem constant byte address 0x4 - core index']
  #allocation1 [shape = 'u32[144,128]{1,0:T(1,128)}', space=vmem, size = 0x12000, scoped, tag = 'internal scratch']
  %s0 = inlined_call_operand.vmem [shape: f32[16,64], index: 0, kind: input, shape index: {}]
  %s1 = inlined_call_operand.vmem [shape: f32[1,64], index: 1, kind: input, shape index: {}]
  %s2 = inlined_call_operand.hbm [shape: bf16[64,64], index: 2, kind: input, shape index: {}]
  %s3 = inlined_call_operand.vmem [shape: f32[1,64], index: 3, kind: input, shape index: {}]
  %s4 = inlined_call_operand.vmem [shape: f32[16,8], index: 4, kind: input, shape index: {}]
  %s5 = inlined_call_operand.vmem [shape: f32[8,64], index: 5, kind: input, shape index: {}]
  %s6 = inlined_call_operand.vmem [shape: f32[1,64], index: 6, kind: input, shape index: {}]
  %s7 = inlined_call_operand.hbm [shape: f32[16,64], index: 7, kind: output, shape index: {}]
  %s8 = sld [smem:[#allocation0]]
  $region42: #{tpu_custom_call.1} parent=0
    _
  %s10 = ssub.s32 1, %s8
  %s11 = scalar_select 0, %s10, %s8
  $region1: #{tpu_custom_call.1} parent=0
    #allocation2 [shape = 'u8[16384]{0}', space=vmem, size = 0x4000, scoped, tag = 'input window, operand 2, single buffered']
    #allocation3 [shape = 's32[1]{0}', space=sflag, size = 0x4, scoped, tag = 'scoped memory for tpu_custom_call.1']
    #allocation4 [shape = 's32[1]{0}', space=sflag, size = 0x4, scoped, tag = 'scoped memory for tpu_custom_call.1']
    #allocation5 [shape = 'u8[8192]{0}', space=vmem, size = 0x2000, scoped, tag = 'output window, operand 0, single buffered']
    %12 = vsyncpa [#allocation3], 0
    %13 = vsyncpa [#allocation4], 0
    // Predicated region
    $region2: #{tpu_custom_call.1} parent=1 // pred_check
      _
    $region3: #{tpu_custom_call.1} parent=1 // pred_check_branch
      %15 = sbr.rel (0) target = $region5
    $region4: #{tpu_custom_call.1} parent=1 // pred_region
      _
    $region5: #{tpu_custom_call.1} parent=1 // pred_fallthru
      _
    // Predicated region
    $region6: #{tpu_custom_call.1} parent=1 // pred_check
      _
    $region7: #{tpu_custom_call.1} parent=1 // pred_check_branch
      %17 = sbr.rel (0) target = $region9
    $region8: #{tpu_custom_call.1} parent=1 // pred_region
      _
    $region9: #{tpu_custom_call.1} parent=1 // pred_fallthru
      _
    // Predicated region
    $region10: #{tpu_custom_call.1} parent=1 // pred_check
      _
    $region11: #{tpu_custom_call.1} parent=1 // pred_check_branch
      %19 = sbr.rel (0) target = $region13
    $region12: #{tpu_custom_call.1} parent=1 // pred_region
      %s21 = ssub.s32 512, 512
      %22 = vsyncadd [#allocation3], %s21
      %s23 = sshll.u32 [#allocation2], 4
      %s24 = int_to_ptr.vmem [resolvable:$true] %s23
      %29 = dma.hbm_to_vmem [thread:$0]  %s2, 512, %s24, [#allocation3], 64, 64, 4
    $region13: #{tpu_custom_call.1} parent=1 // pred_fallthru
      _
    // Predicated region
    $region14: #{tpu_custom_call.1} parent=1 // pred_check
      _
    $region15: #{tpu_custom_call.1} parent=1 // pred_check_branch
      %31 = sbr.rel (0) target = $region17
    $region16: #{tpu_custom_call.1} parent=1 // pred_region
      _
    $region17: #{tpu_custom_call.1} parent=1 // pred_fallthru
      _
    // Predicated region
    $region18: #{tpu_custom_call.1} parent=1 // pred_check
      _
    $region19: #{tpu_custom_call.1} parent=1 // pred_check_branch
      %33 = sbr.rel (0) target = $region21
    $region20: #{tpu_custom_call.1} parent=1 // pred_region
      _
    $region21: #{tpu_custom_call.1} parent=1 // pred_fallthru
      _
    // Predicated region
    $region22: #{tpu_custom_call.1} parent=1 // pred_check
      _
    $region23: #{tpu_custom_call.1} parent=1 // pred_check_branch
      %35 = sbr.rel (0) target = $region25
    $region24: #{tpu_custom_call.1} parent=1 // pred_region
      _
    $region25: #{tpu_custom_call.1} parent=1 // pred_fallthru
      _
    // Predicated region
    $region26: #{tpu_custom_call.1} parent=1 // pred_check
      _
    $region27: #{tpu_custom_call.1} parent=1 // pred_check_branch
      %37 = sbr.rel (0) target = $region29
    $region28: #{tpu_custom_call.1} parent=1 // pred_region
      _
    $region29: #{tpu_custom_call.1} parent=1 // pred_fallthru
      _
    // Predicated region
    $region30: #{tpu_custom_call.1} parent=1 // pred_check
      _
    $region31: #{tpu_custom_call.1} parent=1 // pred_check_branch
      %39 = sbr.rel (0) target = $region33
    $region32: #{tpu_custom_call.1} parent=1 // pred_region
      %40 = dma.done [#allocation3], 512
    $region33: #{tpu_custom_call.1} parent=1 // pred_fallthru
      _
    %v42 = vld [vmem:[%s0] sm:$0xff]
    %v43 = vld [vmem:[%s0 + $0x8] sm:$0xff]
    %v44 = vld [vmem:[%s1] sm:$0x1]
    %v46 = vlaneseq
    %v47 = vshrl.u32 %v46, 7
    %v48 = vsub.s32 0, %v47
    %v49 = vrot.slane %v44, %v48
    %v51 = vmul.f32 %v42, %v49
    %v52 = vmul.f32 %v43, %v49
    %v53 = vand.u32 2147483647, %v51
    %v54 = vand.u32 2147483647, %v52
    %vm55 = vcmask 523264
    %v56 = vsel %vm55, %v53, -inf
    %57 = vmax.xlane.f32.xlu0 %v56
    %v58 = vpop.xlane.xlu0 %57
    %v59 = vsel %vm55, %v54, -inf
    %60 = vmax.xlane.f32.xlu0 %v59
    %v61 = vpop.xlane.xlu0 %60
    %v62 = vrcp.pop 127.0
    %v63 = vmul.f32 %v58, %v62
    %v64 = vmul.f32 %v61, %v62
    %vm65 = vcmp.gt.f32.partialorder %v63, 0.0
    %vm66 = vcmp.gt.f32.partialorder %v64, 0.0
    %v67 = vsel %vm65, %v63, 1.0
    %v68 = vsel %vm66, %v64, 1.0
    %v69 = vrcp.pop %v67
    %v70 = vmul.f32 %v51, %v69
    %v71 = vrcp.pop %v68
    %v72 = vmul.f32 %v52, %v71
    %vm73 = vcmp.lt.f32.partialorder %v70, 0.0
    %vm74 = vcmp.lt.f32.partialorder %v72, 0.0
    %v75 = vceil.f32 %v70
    %v76 = vceil.f32 %v72
    %v77 = vfloor.f32 %v70
    %v78 = vfloor.f32 %v72
    %v79 = vsel %vm73, %v75, %v77
    %v80 = vsel %vm74, %v76, %v78
    %v81 = vpack.c.bf16 %v80, %v79
    %v82 = vld [vmem:[#allocation2] sm:$0xf]
    %v83 = vld [vmem:[#allocation2 + $0x4] sm:$0xf]
    %v84 = vld [vmem:[#allocation2 + $0x8] sm:$0xf]
    %v85 = vld [vmem:[#allocation2 + $0xc] sm:$0xf]
    %v86 = vld [vmem:[#allocation2 + $0x10] sm:$0xf]
    %v87 = vld [vmem:[#allocation2 + $0x14] sm:$0xf]
    %v88 = vld [vmem:[#allocation2 + $0x18] sm:$0xf]
    %v89 = vld [vmem:[#allocation2 + $0x1c] sm:$0xf]
    %v98 = vunpack.c.l.b16 %v82
    %v99 = vunpack.c.l.b16 %v83
    %v100 = vunpack.c.l.b16 %v84
    %v101 = vunpack.c.l.b16 %v85
    %v102 = vunpack.c.l.b16 %v86
    %v103 = vunpack.c.l.b16 %v87
    %v104 = vunpack.c.l.b16 %v88
    %v105 = vunpack.c.l.b16 %v89
    %v106 = vpack.c.b16 %v99, %v98
    %v107 = vpack.c.b16 %v101, %v100
    %v108 = vpack.c.b16 %v103, %v102
    %v109 = vpack.c.b16 %v105, %v104
    %v115 = vsel %vm55, %v81, 0
    %117 = vmatprep.subr.bf16.mxu0 0
    %118 = vmatpush1.bf16.msra.mxu0 %v106
    %119 = vmatprep.subr.bf16.mxu0 0
    %120 = vmatpush1.bf16.msra.mxu0 %v107
    %121 = vmatprep.subr.bf16.mxu0 0
    %122 = vmatpush1.bf16.msra.mxu0 %v108
    %123 = vmatprep.subr.bf16.mxu0 0
    %124 = vmatpush1.bf16.msra.mxu0 %v109
    %125 = vmatprep.subr.bf16.mxu0 0
    %126 = vmatpush1.bf16.msra.mxu0 0
    %127 = vmatprep.subr.bf16.mxu0 0
    %128 = vmatpush1.bf16.msra.mxu0 0
    %129 = vmatprep.subr.bf16.mxu0 0
    %130 = vmatpush1.bf16.msra.mxu0 0
    %131 = vmatprep.subr.bf16.mxu0 0
    %132 = vmatpush1.bf16.msra.mxu0 0
    %133 = vmatprep.subr.bf16.mxu0 0
    %134 = vmatpush1.bf16.msra.mxu0 0
    %135 = vmatprep.subr.bf16.mxu0 0
    %136 = vmatpush1.bf16.msra.mxu0 0
    %137 = vmatprep.subr.bf16.mxu0 0
    %138 = vmatpush1.bf16.msra.mxu0 0
    %139 = vmatprep.subr.bf16.mxu0 0
    %140 = vmatpush1.bf16.msra.mxu0 0
    %141 = vmatprep.subr.bf16.mxu0 0
    %142 = vmatpush1.bf16.msra.mxu0 0
    %143 = vmatprep.subr.bf16.mxu0 0
    %144 = vmatpush1.bf16.msra.mxu0 0
    %145 = vmatprep.subr.bf16.mxu0 0
    %146 = vmatpush1.bf16.msra.mxu0 0
    %147 = vmatprep.subr.bf16.mxu0 0
    %148 = vmatpush1.bf16.msra.mxu0 0
    %149 = vmatprep.mubr.bf16.mxu0 0
    %150 = vmatmul.mubr.bf16.gmra.mrb[0].mxu0 %v115
    %v151 = vpop.f32.mrb[0].mxu0
    %v152 = vadd.f32 0.0, %v151
    %v153 = vpop.f32.mrb[0].mxu0
    %v154 = vpop.f32.mrb[0].mxu0
    %v155 = vadd.f32 0.0, %v154
    %v156 = vpop.f32.mrb[0].mxu0
    %157 = vdwg.mxu0
    %v158 = vmul.f32 %v152, %v63
    %v159 = vmul.f32 %v155, %v64
    %v160 = vld [vmem:[%s3] sm:$0x1]
    %v162 = vlaneseq
    %v163 = vshrl.u32 %v162, 7
    %v164 = vsub.s32 0, %v163
    %v165 = vrot.slane %v160, %v164
    %v167 = vmul.f32 %v158, %v165
    %v168 = vmul.f32 %v159, %v165
    %v169 = vld [vmem:[%s4] sm:$0xff]
    %v170 = vld [vmem:[%s4 + $0x8] sm:$0xff]
    %v171 = vld [vmem:[%s5] sm:$0xff]
    %vm172 = vcmask 64512
    %v174 = vsel %vm172, %v169, 0
    %v177 = vsel %vm172, %v170, 0
    %179 = vmatprep.subr.mxu0 0.0
    %180 = vmatpush1.msra.mxu0 %v171
    %181 = vmatprep.subr.mxu0 0.0
    %182 = vmatpush1.msra.mxu0 0.0
    %183 = vmatprep.subr.mxu0 0.0
    %184 = vmatpush1.msra.mxu0 0.0
    %185 = vmatprep.subr.mxu0 0.0
    %186 = vmatpush1.msra.mxu0 0.0
    %187 = vmatprep.subr.mxu0 0.0
    %188 = vmatpush1.msra.mxu0 0.0
    %189 = vmatprep.subr.mxu0 0.0
    %190 = vmatpush1.msra.mxu0 0.0
    %191 = vmatprep.subr.mxu0 0.0
    %192 = vmatpush1.msra.mxu0 0.0
    %193 = vmatprep.subr.mxu0 0.0
    %194 = vmatpush1.msra.mxu0 0.0
    %195 = vmatprep.subr.mxu0 0.0
    %196 = vmatpush1.msra.mxu0 0.0
    %197 = vmatprep.subr.mxu0 0.0
    %198 = vmatpush1.msra.mxu0 0.0
    %199 = vmatprep.subr.mxu0 0.0
    %200 = vmatpush1.msra.mxu0 0.0
    %201 = vmatprep.subr.mxu0 0.0
    %202 = vmatpush1.msra.mxu0 0.0
    %203 = vmatprep.subr.mxu0 0.0
    %204 = vmatpush1.msra.mxu0 0.0
    %205 = vmatprep.subr.mxu0 0.0
    %206 = vmatpush1.msra.mxu0 0.0
    %207 = vmatprep.subr.mxu0 0.0
    %208 = vmatpush1.msra.mxu0 0.0
    %209 = vmatprep.subr.mxu0 0.0
    %210 = vmatpush1.msra.mxu0 0.0
    %211 = vmatprep.subr.mxu0 0.0
    %212 = vmatpush1.msra.mxu0 0.0
    %213 = vmatprep.subr.mxu0 0.0
    %214 = vmatpush1.msra.mxu0 0.0
    %215 = vmatprep.subr.mxu0 0.0
    %216 = vmatpush1.msra.mxu0 0.0
    %217 = vmatprep.subr.mxu0 0.0
    %218 = vmatpush1.msra.mxu0 0.0
    %219 = vmatprep.subr.mxu0 0.0
    %220 = vmatpush1.msra.mxu0 0.0
    %221 = vmatprep.subr.mxu0 0.0
    %222 = vmatpush1.msra.mxu0 0.0
    %223 = vmatprep.subr.mxu0 0.0
    %224 = vmatpush1.msra.mxu0 0.0
    %225 = vmatprep.subr.mxu0 0.0
    %226 = vmatpush1.msra.mxu0 0.0
    %227 = vmatprep.subr.mxu0 0.0
    %228 = vmatpush1.msra.mxu0 0.0
    %229 = vmatprep.subr.mxu0 0.0
    %230 = vmatpush1.msra.mxu0 0.0
    %231 = vmatprep.subr.mxu0 0.0
    %232 = vmatpush1.msra.mxu0 0.0
    %233 = vmatprep.subr.mxu0 0.0
    %234 = vmatpush1.msra.mxu0 0.0
    %235 = vmatprep.subr.mxu0 0.0
    %236 = vmatpush1.msra.mxu0 0.0
    %237 = vmatprep.subr.mxu0 0.0
    %238 = vmatpush1.msra.mxu0 0.0
    %239 = vmatprep.subr.mxu0 0.0
    %240 = vmatpush1.msra.mxu0 0.0
    %241 = vmatprep.subr.mxu0 0.0
    %242 = vmatpush1.msra.mxu0 0.0
    %243 = vmatprep.mubr.f32.mxu0 0.0
    %244 = vmatmul.mubr.f32.gmra.mrb[0].mxu0 %v174
    %v245 = vpop.f32.mrb[0].mxu0
    %v246 = vadd.f32 0.0, %v245
    %v247 = vpop.f32.mrb[0].mxu0
    %248 = vmatprep.mubr.f32.mxu0 0.0
    %249 = vmatmul.mubr.f32.gmra.mrb[0].mxu0 %v177
    %v250 = vpop.f32.mrb[0].mxu0
    %v251 = vadd.f32 0.0, %v250
    %v252 = vpop.f32.mrb[0].mxu0
    %253 = vdwg.mxu0
    %v254 = vadd.f32 %v167, %v246
    %v255 = vadd.f32 %v168, %v251
    %v256 = vld [vmem:[%s6] sm:$0x1]
    %v258 = vlaneseq
    %v259 = vshrl.u32 %v258, 7
    %v260 = vsub.s32 0, %v259
    %v261 = vrot.slane %v256, %v260
    %v263 = vadd.f32 %v254, %v261
    %v264 = vadd.f32 %v255, %v261
    %265 = vst.msk [vmem:[#allocation5] sm:$0xff] %vm55, %v263
    %266 = vst.msk [vmem:[#allocation5 + $0x8] sm:$0xff] %vm55, %v264
    // Predicated region
    $region34: #{tpu_custom_call.1} parent=1 // pred_check
      _
    $region35: #{tpu_custom_call.1} parent=1 // pred_check_branch
      %268 = sbr.rel (0) target = $region37
    $region36: #{tpu_custom_call.1} parent=1 // pred_region
      %s270 = ssub.s32 256, 256
      %271 = vsyncadd [#allocation4], %s270
      %s272 = sshll.u32 [#allocation5], 4
      %s273 = int_to_ptr.vmem [resolvable:$true] %s272
      %278 = dma.vmem_to_hbm [thread:$0]  %s273, 256, %s7, [#allocation4], 128, 128, 8
    $region37: #{tpu_custom_call.1} parent=1 // pred_fallthru
      _
    // Predicated region
    $region38: #{tpu_custom_call.1} parent=1 // pred_check
      _
    $region39: #{tpu_custom_call.1} parent=1 // pred_check_branch
      %280 = sbr.rel (0) target = $region41
    $region40: #{tpu_custom_call.1} parent=1 // pred_region
      %281 = dma.done [#allocation4], 256
    $region41: #{tpu_custom_call.1} parent=1 // pred_fallthru
      _
    %282 = vsyncpa [#allocation3], 1
    %283 = vsyncpa [#allocation4], 1

</llo_original>
